<compile_context>
chip_gen: v5e
topology: v5e:2x2
jax: 0.10.0
libtpu: 0.0.40
codegen_flags: <defaults>
</compile_context>

<pallas_src>
import math
from functools import partial

import jax
import jax.numpy as jnp
from jax import lax
from jax.experimental import pallas as pl
from jax.experimental.pallas import tpu as pltpu


CH = 16           # hidden width (self.ch)
TEMB_CH = 16      # time-embedding width (self.temb_ch)
HALF = TEMB_CH // 2
_DEFAULT_BLOCK_B = 8192   # batch rows per tile (sweep 8K-16K); multiple of 128


def _round_up(n, m):
    return ((n + m - 1) // m) * m


def _ufunc_temb_kernel(x_ref, t_ref, wa_ref, wb_ref, misc_ref, out_ref):
    """One batch tile. Activations are [features, TB] (batch on lanes);
    x arrives in natural [TB, in_ch] layout and is contracted directly."""
    in_ch = x_ref.shape[1]

    # misc slab (columns): 0 = b1+bp1, 1 = b2+bp2, 2 = w4 row, 3[:HALF] = freqs, 4[0] = b4
    b1 = misc_ref[:, 0:1]             # [CH, 1]
    b2 = misc_ref[:, 1:2]             # [CH, 1]
    w4 = misc_ref[:, 2:3]             # [CH, 1]
    freqs = misc_ref[0:HALF, 3:4]     # [HALF, 1]
    b4 = misc_ref[0:1, 4:5]           # [1, 1]

    # Sinusoidal time-embedding halves, batch on lanes. (t cast to f32 in the
    # wrapper: timesteps above 2^24 would lose integer precision — irrelevant
    # for typical diffusion schedules.)
    phase = freqs * t_ref[...]        # [HALF, TB]
    s = jnp.sin(phase)                # sin half of temb
    c = jnp.cos(phase)                # cos half of temb

    def silu(h):
        # sigmoid(h) == 0.5*tanh(0.5*h) + 0.5 : a single EUP op instead of
        # exp + reciprocal; error ~1e-6, well inside the 1e-4 tolerance.
        return h * (0.5 * jnp.tanh(0.5 * h) + 0.5)

    # ---- Layer 1: W1^T @ x^T + Wp1_sin^T @ sin + Wp1_cos^T @ cos + (b1+bp1) ----
    # Contraction on the last axes of both operands lets the MXU absorb x's
    # transpose (no wrapper relayout, no in-kernel concatenate).
    g = lax.dot_general(
        wa_ref[:, :in_ch], x_ref[...],
        dimension_numbers=(((1,), (1,)), ((), ())),
        preferred_element_type=jnp.float32)                              # [CH, TB]
    g = g + jnp.dot(wa_ref[:, in_ch:in_ch + HALF], s,
                    preferred_element_type=jnp.float32)
    g = g + jnp.dot(wa_ref[:, in_ch + HALF:], c,
                    preferred_element_type=jnp.float32)
    h = silu(g + b1)

    # ---- Layer 2: W2^T @ h + Wp2_sin^T @ sin + Wp2_cos^T @ cos + (b2+bp2) ----
    g = jnp.dot(wb_ref[:, :CH], h, preferred_element_type=jnp.float32)   # [CH, TB]
    g = g + jnp.dot(wb_ref[:, CH:CH + HALF], s,
                    preferred_element_type=jnp.float32)
    g = g + jnp.dot(wb_ref[:, CH + HALF:], c,
                    preferred_element_type=jnp.float32)
    h = silu(g + b2)

    # lin4 (output width 1): VPU multiply + sublane reduce -> lane-dense [1, TB].
    out_ref[...] = jnp.sum(h * w4, axis=0, keepdims=True) + b4


def _pack_params(params):
    """Pack per-layer Linear params into the kernel's fused resident operands."""
    # Weights arrive as [in, out]; kernel wants [out, in] (batch-on-lanes layout).
    wa = jnp.concatenate([params["w1"].T, params["wp1"].T], axis=1)   # [CH, in_ch+TEMB_CH]
    wb = jnp.concatenate([params["w2"].T, params["wp2"].T], axis=1)   # [CH, CH+TEMB_CH]

    freqs = jnp.exp(
        jnp.arange(HALF, dtype=jnp.float32) * -(math.log(10000.0) / (HALF - 1))
    )
    misc = jnp.zeros((CH, 8), jnp.float32)
    misc = misc.at[:, 0].set((params["b1"] + params["bp1"]).reshape(CH))
    misc = misc.at[:, 1].set((params["b2"] + params["bp2"]).reshape(CH))
    misc = misc.at[:, 2].set(params["w4"].reshape(CH))
    misc = misc.at[:HALF, 3].set(freqs)
    misc = misc.at[0, 4].set(params["b4"].reshape(()))
    return wa, wb, misc


def _choose_tiling(B, in_ch, block_b):
    """Pick (tile rows, #tiles): 128-aligned equal tiles, minimal padded waste,
    VMEM-budgeted so the working set fits every generation's default scoped VMEM."""
    b128 = _round_up(max(B, 1), 128)
    # Per-row VMEM (f32): x tile is lane-padded to >=128 lanes and double-buffered;
    # ~0.5 KiB covers temb halves, hidden activations, temporaries, t/out blocks.
    x_row = 4 * _round_up(max(in_ch, 1), 128)
    per_row = 2 * x_row + 512
    budget = 13 * 1024 * 1024          # under v5e's 16 MiB default scoped VMEM
    tb_cap = max(128, (budget // per_row) // 128 * 128)
    tb_target = max(128, min(_round_up(block_b, 128), tb_cap))
    if b128 <= tb_target:
        return b128, 1
    n_tiles = pl.cdiv(b128, tb_target)
    if n_tiles % 2:                    # even tile count -> both v7x TensorCores busy
        n_tiles += 1
    tb = _round_up(pl.cdiv(b128, n_tiles), 128)
    return tb, n_tiles


@partial(jax.jit, static_argnames=("block_b",))
def my_ufunc_temb_forward(x, t, params, block_b=_DEFAULT_BLOCK_B):
    """x: [B, ...] (flattened to [B, in_ch]); t: [B, 1] integer timesteps -> [B, 1]."""
    B = x.shape[0]
    x_flat = x.reshape(B, -1).astype(jnp.float32)
    in_ch = x_flat.shape[1]
    t_flat = t.reshape(B).astype(jnp.float32)

    tb, n_tiles = _choose_tiling(B, in_ch, block_b)
    b_pad = tb * n_tiles

    # x stays in its natural [B, in_ch] layout: no HBM transpose pre-pass.
    # Pad rows only when needed (no-op / elided when B already tiles evenly).
    x_p = x_flat if b_pad == B else jnp.pad(x_flat, ((0, b_pad - B), (0, 0)))
    t_p = t_flat if b_pad == B else jnp.pad(t_flat, (0, b_pad - B))
    t_p = t_p.reshape(1, b_pad)        # free row-major reshape, no relayout

    wa, wb, misc = _pack_params(params)

    out_t = pl.pallas_call(
        _ufunc_temb_kernel,
        out_shape=jax.ShapeDtypeStruct((1, b_pad), jnp.float32),
        grid=(n_tiles,),
        in_specs=[
            pl.BlockSpec((tb, in_ch), lambda i: (i, 0)),            # x tile (natural layout)
            pl.BlockSpec((1, tb), lambda i: (0, i)),                # t tile (batch on lanes)
            pl.BlockSpec((CH, in_ch + TEMB_CH), lambda i: (0, 0)),  # fused W1|Wp1 (resident)
            pl.BlockSpec((CH, CH + TEMB_CH), lambda i: (0, 0)),     # fused W2|Wp2 (resident)
            pl.BlockSpec((CH, 8), lambda i: (0, 0)),                # misc slab (resident)
        ],
        out_specs=pl.BlockSpec((1, tb), lambda i: (0, i)),
        compiler_params=pltpu.CompilerParams(
            dimension_semantics=("parallel",),
        ),
    )(x_p, t_p, wa, wb, misc)

    return out_t.reshape(b_pad, 1)[:B]


def make_params(key, in_ch):
    """Deterministic synthetic parameters (PyTorch Linear shapes, transposed to [in, out])."""
    ks = jax.random.split(key, 5)

    def lin(k, fan_in, fan_out):
        kw, kb = jax.random.split(k)
        w = jax.random.normal(kw, (fan_in, fan_out), jnp.float32) * 0.1
        b = jax.random.normal(kb, (1, fan_out), jnp.float32) * 0.1
        return w, b

    w1, b1 = lin(ks[0], in_ch, CH)        # lin1
    w2, b2 = lin(ks[1], CH, CH)           # lin2
    w4, b4 = lin(ks[2], CH, 1)            # lin4
    wp1, bp1 = lin(ks[3], TEMB_CH, CH)    # temb_proj1
    wp2, bp2 = lin(ks[4], TEMB_CH, CH)    # temb_proj2
    return dict(w1=w1, b1=b1, w2=w2, b2=b2, w4=w4, b4=b4,
                wp1=wp1, bp1=bp1, wp2=wp2, bp2=bp2)


def reference_forward(x, t, params):
    """Pure-JAX reference mirroring the PyTorch module, for correctness check."""
    B = x.shape[0]
    xf = x.reshape(B, -1).astype(jnp.float32)
    tf = t.reshape(B, 1).astype(jnp.float32)
    freqs = jnp.exp(
        jnp.arange(HALF, dtype=jnp.float32) * -(math.log(10000.0) / (HALF - 1))
    )
    phase = tf * freqs[None, :]
    temb = jnp.concatenate([jnp.sin(phase), jnp.cos(phase)], axis=1)
    silu = lambda h: h * jax.nn.sigmoid(h)
    h = silu(xf @ params["w1"] + params["b1"] + temb @ params["wp1"] + params["bp1"])
    h = silu(h @ params["w2"] + params["b2"] + temb @ params["wp2"] + params["bp2"])
    return h @ params["w4"] + params["b4"]


if __name__ == "__main__":
    key = jax.random.PRNGKey(0)
    k_x, k_t, k_p = jax.random.split(key, 3)

    B, in_ch, n_timesteps = 8, 8, 10
    x = jax.random.normal(k_x, (B, in_ch), jnp.float32)
    t = jax.random.randint(k_t, (B, 1), 0, n_timesteps, jnp.int32)
    params = make_params(k_p, in_ch)

    out = my_ufunc_temb_forward(x, t, params)
    out = jax.block_until_ready(out)

    ref = reference_forward(x, t, params)
    assert out.shape == (B, 1)
    assert jnp.allclose(out, ref, atol=1e-4, rtol=1e-4), (out, ref)
    print("KERNEL_OK")
</pallas_src>

<mosaic_0001>
module attributes {stable_mosaic.version = 11 : i64} {
  func.func @_ufunc_temb_kernel(%arg0: i32, %arg1: memref<128x8xf32, #tpu.memory_space<vmem>>, %arg2: memref<1x128xf32, #tpu.memory_space<vmem>>, %arg3: memref<16x24xf32, #tpu.memory_space<vmem>>, %arg4: memref<16x32xf32, #tpu.memory_space<vmem>>, %arg5: memref<16x8xf32, #tpu.memory_space<vmem>>, %arg6: memref<1x128xf32, #tpu.memory_space<vmem>>) attributes {dimension_semantics = [#tpu.dimension_semantics<parallel>], iteration_bounds = array<i64: 1>, scalar_prefetch = 0 : i64, scratch_operands = 0 : i64, tpu.core_type = #tpu.core_type<tc>, window_params = [{transform_indices = @transform_0, window_bounds = array<i64: 128, 8>}, {transform_indices = @transform_1, window_bounds = array<i64: 1, 128>}, {pipeline_mode = #tpu.pipeline_mode<synchronous>, transform_indices = @transform_2, window_bounds = array<i64: 16, 24>}, {pipeline_mode = #tpu.pipeline_mode<synchronous>, transform_indices = @transform_3, window_bounds = array<i64: 16, 32>}, {pipeline_mode = #tpu.pipeline_mode<synchronous>, transform_indices = @transform_4, window_bounds = array<i64: 16, 8>}, {transform_indices = @transform_5, window_bounds = array<i64: 1, 128>}]} {
    %c0 = arith.constant 0 : index
    %c0_0 = arith.constant 0 : index
    %0 = vector.load %arg5[%c0, %c0_0] : memref<16x8xf32, #tpu.memory_space<vmem>>, vector<16x1xf32>
    %c0_1 = arith.constant 0 : index
    %c1 = arith.constant 1 : index
    %1 = vector.load %arg5[%c0_1, %c1] : memref<16x8xf32, #tpu.memory_space<vmem>>, vector<16x1xf32>
    %c0_2 = arith.constant 0 : index
    %c2 = arith.constant 2 : index
    %2 = vector.load %arg5[%c0_2, %c2] : memref<16x8xf32, #tpu.memory_space<vmem>>, vector<16x1xf32>
    %c0_3 = arith.constant 0 : index
    %c3 = arith.constant 3 : index
    %3 = vector.load %arg5[%c0_3, %c3] : memref<16x8xf32, #tpu.memory_space<vmem>>, vector<8x1xf32>
    %c0_4 = arith.constant 0 : index
    %c4 = arith.constant 4 : index
    %4 = vector.load %arg5[%c0_4, %c4] : memref<16x8xf32, #tpu.memory_space<vmem>>, vector<1x1xf32>
    %c0_5 = arith.constant 0 : index
    %c0_6 = arith.constant 0 : index
    %5 = vector.load %arg2[%c0_5, %c0_6] : memref<1x128xf32, #tpu.memory_space<vmem>>, vector<1x128xf32>
    %6 = vector.broadcast %3 : vector<8x1xf32> to vector<8x128xf32>
    %7 = vector.broadcast %5 : vector<1x128xf32> to vector<8x128xf32>
    %8 = arith.mulf %6, %7 : vector<8x128xf32>
    %9 = math.sin %8 : vector<8x128xf32>
    %10 = math.cos %8 : vector<8x128xf32>
    %c0_7 = arith.constant 0 : index
    %c0_8 = arith.constant 0 : index
    %11 = vector.load %arg3[%c0_7, %c0_8] : memref<16x24xf32, #tpu.memory_space<vmem>>, vector<16x8xf32>
    %c0_9 = arith.constant 0 : index
    %c0_10 = arith.constant 0 : index
    %12 = vector.load %arg1[%c0_9, %c0_10] : memref<128x8xf32, #tpu.memory_space<vmem>>, vector<128x8xf32>
    %cst = arith.constant dense<0.000000e+00> : vector<16x128xf32>
    %13 = tpu.matmul %11, %12, %cst {dimension_numbers = #tpu.dot_dimension_numbers<[1], [1], [0], [0], [0, 0, 1, 0], [], []>} : vector<16x8xf32>, vector<128x8xf32>, vector<16x128xf32> -> vector<16x128xf32>
    %c0_11 = arith.constant 0 : index
    %c8 = arith.constant 8 : index
    %14 = vector.load %arg3[%c0_11, %c8] : memref<16x24xf32, #tpu.memory_space<vmem>>, vector<16x8xf32>
    %cst_12 = arith.constant dense<0.000000e+00> : vector<16x128xf32>
    %15 = tpu.matmul %14, %9, %cst_12 {dimension_numbers = #tpu.dot_dimension_numbers<[1], [0], [0], [1], [0, 0, 1, 1], [], []>} : vector<16x8xf32>, vector<8x128xf32>, vector<16x128xf32> -> vector<16x128xf32>
    %16 = arith.addf %13, %15 : vector<16x128xf32>
    %c0_13 = arith.constant 0 : index
    %c16 = arith.constant 16 : index
    %17 = vector.load %arg3[%c0_13, %c16] : memref<16x24xf32, #tpu.memory_space<vmem>>, vector<16x8xf32>
    %cst_14 = arith.constant dense<0.000000e+00> : vector<16x128xf32>
    %18 = tpu.matmul %17, %10, %cst_14 {dimension_numbers = #tpu.dot_dimension_numbers<[1], [0], [0], [1], [0, 0, 1, 1], [], []>} : vector<16x8xf32>, vector<8x128xf32>, vector<16x128xf32> -> vector<16x128xf32>
    %19 = arith.addf %16, %18 : vector<16x128xf32>
    %20 = vector.broadcast %0 : vector<16x1xf32> to vector<16x128xf32>
    %21 = arith.addf %19, %20 : vector<16x128xf32>
    %cst_15 = arith.constant 5.000000e-01 : f32
    %22 = vector.broadcast %cst_15 : f32 to vector<16x128xf32>
    %23 = arith.mulf %22, %21 : vector<16x128xf32>
    %24 = math.tanh %23 : vector<16x128xf32>
    %cst_16 = arith.constant 5.000000e-01 : f32
    %25 = vector.broadcast %cst_16 : f32 to vector<16x128xf32>
    %26 = arith.mulf %25, %24 : vector<16x128xf32>
    %cst_17 = arith.constant 5.000000e-01 : f32
    %27 = vector.broadcast %cst_17 : f32 to vector<16x128xf32>
    %28 = arith.addf %26, %27 : vector<16x128xf32>
    %29 = arith.mulf %21, %28 : vector<16x128xf32>
    %c0_18 = arith.constant 0 : index
    %c0_19 = arith.constant 0 : index
    %30 = vector.load %arg4[%c0_18, %c0_19] : memref<16x32xf32, #tpu.memory_space<vmem>>, vector<16x16xf32>
    %cst_20 = arith.constant dense<0.000000e+00> : vector<16x128xf32>
    %31 = tpu.matmul %30, %29, %cst_20 {dimension_numbers = #tpu.dot_dimension_numbers<[1], [0], [0], [1], [0, 0, 1, 1], [], []>} : vector<16x16xf32>, vector<16x128xf32>, vector<16x128xf32> -> vector<16x128xf32>
    %c0_21 = arith.constant 0 : index
    %c16_22 = arith.constant 16 : index
    %32 = vector.load %arg4[%c0_21, %c16_22] : memref<16x32xf32, #tpu.memory_space<vmem>>, vector<16x8xf32>
    %cst_23 = arith.constant dense<0.000000e+00> : vector<16x128xf32>
    %33 = tpu.matmul %32, %9, %cst_23 {dimension_numbers = #tpu.dot_dimension_numbers<[1], [0], [0], [1], [0, 0, 1, 1], [], []>} : vector<16x8xf32>, vector<8x128xf32>, vector<16x128xf32> -> vector<16x128xf32>
    %34 = arith.addf %31, %33 : vector<16x128xf32>
    %c0_24 = arith.constant 0 : index
    %c24 = arith.constant 24 : index
    %35 = vector.load %arg4[%c0_24, %c24] : memref<16x32xf32, #tpu.memory_space<vmem>>, vector<16x8xf32>
    %cst_25 = arith.constant dense<0.000000e+00> : vector<16x128xf32>
    %36 = tpu.matmul %35, %10, %cst_25 {dimension_numbers = #tpu.dot_dimension_numbers<[1], [0], [0], [1], [0, 0, 1, 1], [], []>} : vector<16x8xf32>, vector<8x128xf32>, vector<16x128xf32> -> vector<16x128xf32>
    %37 = arith.addf %34, %36 : vector<16x128xf32>
    %38 = vector.broadcast %1 : vector<16x1xf32> to vector<16x128xf32>
    %39 = arith.addf %37, %38 : vector<16x128xf32>
    %cst_26 = arith.constant 5.000000e-01 : f32
    %40 = vector.broadcast %cst_26 : f32 to vector<16x128xf32>
    %41 = arith.mulf %40, %39 : vector<16x128xf32>
    %42 = math.tanh %41 : vector<16x128xf32>
    %cst_27 = arith.constant 5.000000e-01 : f32
    %43 = vector.broadcast %cst_27 : f32 to vector<16x128xf32>
    %44 = arith.mulf %43, %42 : vector<16x128xf32>
    %cst_28 = arith.constant 5.000000e-01 : f32
    %45 = vector.broadcast %cst_28 : f32 to vector<16x128xf32>
    %46 = arith.addf %44, %45 : vector<16x128xf32>
    %47 = arith.mulf %39, %46 : vector<16x128xf32>
    %48 = vector.broadcast %2 : vector<16x1xf32> to vector<16x128xf32>
    %49 = arith.mulf %47, %48 : vector<16x128xf32>
    %cst_29 = arith.constant dense<0.000000e+00> : vector<128xf32>
    %50 = vector.multi_reduction <add>, %49, %cst_29 [0] : vector<16x128xf32> to vector<128xf32>
    %51 = vector.shape_cast %50 : vector<128xf32> to vector<1x128xf32>
    %52 = vector.broadcast %4 : vector<1x1xf32> to vector<1x128xf32>
    %53 = arith.addf %51, %52 : vector<1x128xf32>
    %c0_30 = arith.constant 0 : index
    %c0_31 = arith.constant 0 : index
    %54 = vector.load %arg6[%c0_30, %c0_31] : memref<1x128xf32, #tpu.memory_space<vmem>>, vector<1x128xf32>
    tpu.vector_store %arg6[%c0_30, %c0_31], %53 {strides = array<i32>} : memref<1x128xf32, #tpu.memory_space<vmem>>, vector<1x128xf32>,
    return
  }
  func.func @transform_0(%arg0: i32) -> (i32, i32) {
    %c0_i32 = arith.constant 0 : i32
    %c0_i32_0 = arith.constant 0 : i32
    return %arg0, %c0_i32 : i32, i32
  }
  func.func @transform_1(%arg0: i32) -> (i32, i32) {
    %c0_i32 = arith.constant 0 : i32
    %c0_i32_0 = arith.constant 0 : i32
    return %c0_i32, %arg0 : i32, i32
  }
  func.func @transform_2(%arg0: i32) -> (i32, i32) {
    %c0_i32 = arith.constant 0 : i32
    %c0_i32_0 = arith.constant 0 : i32
    %c0_i32_1 = arith.constant 0 : i32
    return %c0_i32, %c0_i32_0 : i32, i32
  }
  func.func @transform_3(%arg0: i32) -> (i32, i32) {
    %c0_i32 = arith.constant 0 : i32
    %c0_i32_0 = arith.constant 0 : i32
    %c0_i32_1 = arith.constant 0 : i32
    return %c0_i32, %c0_i32_0 : i32, i32
  }
  func.func @transform_4(%arg0: i32) -> (i32, i32) {
    %c0_i32 = arith.constant 0 : i32
    %c0_i32_0 = arith.constant 0 : i32
    %c0_i32_1 = arith.constant 0 : i32
    return %c0_i32, %c0_i32_0 : i32, i32
  }
  func.func @transform_5(%arg0: i32) -> (i32, i32) {
    %c0_i32 = arith.constant 0 : i32
    %c0_i32_0 = arith.constant 0 : i32
    return %c0_i32, %arg0 : i32, i32
  }
}

</mosaic_0001>

<llo_original>
// kernel: my_ufunc_temb_forward.1
$region0: #{my_ufunc_temb_forward.1}
  #allocation0 [shape = 'u32[]', space=smem, size = 0x4, offset = 0x4, fixed_abs, tag = 'smem constant byte address 0x4 - core index']
  #allocation1 [shape = 'u32[72,128]{1,0:T(1,128)}', space=vmem, size = 0x9000, scoped, tag = 'internal scratch']
  %s0 = inlined_call_operand.vmem [shape: f32[128,8], index: 0, kind: input, shape index: {}]
  %s1 = inlined_call_operand.vmem [shape: f32[1,128], index: 1, kind: input, shape index: {}]
  %s2 = inlined_call_operand.vmem [shape: f32[16,24], index: 2, kind: input, shape index: {}]
  %s3 = inlined_call_operand.vmem [shape: f32[16,32], index: 3, kind: input, shape index: {}]
  %s4 = inlined_call_operand.vmem [shape: f32[16,8], index: 4, kind: input, shape index: {}]
  %s5 = inlined_call_operand.vmem [shape: f32[1,128], index: 5, kind: output, shape index: {}]
  %s6 = sld [smem:[#allocation0]]
  $region30: #{my_ufunc_temb_forward.1} parent=0
    _
  %s8 = ssub.s32 1, %s6
  %s9 = scalar_select 0, %s8, %s6
  // Predicated region
  $region2: #{my_ufunc_temb_forward.1} parent=0 // pred_check
    _
  $region3: #{my_ufunc_temb_forward.1} parent=0 // pred_check_branch
    %11 = sbr.rel (0) target = $region5
  $region4: #{my_ufunc_temb_forward.1} parent=0 // pred_region
    _
  $region5: #{my_ufunc_temb_forward.1} parent=0 // pred_fallthru
    _
  // Predicated region
  $region6: #{my_ufunc_temb_forward.1} parent=0 // pred_check
    _
  $region7: #{my_ufunc_temb_forward.1} parent=0 // pred_check_branch
    %13 = sbr.rel (0) target = $region9
  $region8: #{my_ufunc_temb_forward.1} parent=0 // pred_region
    _
  $region9: #{my_ufunc_temb_forward.1} parent=0 // pred_fallthru
    _
  // Predicated region
  $region10: #{my_ufunc_temb_forward.1} parent=0 // pred_check
    _
  $region11: #{my_ufunc_temb_forward.1} parent=0 // pred_check_branch
    %15 = sbr.rel (0) target = $region13
  $region12: #{my_ufunc_temb_forward.1} parent=0 // pred_region
    _
  $region13: #{my_ufunc_temb_forward.1} parent=0 // pred_fallthru
    _
  // Predicated region
  $region14: #{my_ufunc_temb_forward.1} parent=0 // pred_check
    _
  $region15: #{my_ufunc_temb_forward.1} parent=0 // pred_check_branch
    %17 = sbr.rel (0) target = $region17
  $region16: #{my_ufunc_temb_forward.1} parent=0 // pred_region
    _
  $region17: #{my_ufunc_temb_forward.1} parent=0 // pred_fallthru
    _
  // Predicated region
  $region18: #{my_ufunc_temb_forward.1} parent=0 // pred_check
    _
  $region19: #{my_ufunc_temb_forward.1} parent=0 // pred_check_branch
    %19 = sbr.rel (0) target = $region21
  $region20: #{my_ufunc_temb_forward.1} parent=0 // pred_region
    _
  $region21: #{my_ufunc_temb_forward.1} parent=0 // pred_fallthru
    _
  %v20 = vld [vmem:[%s4] sm:$0xff]
  %v21 = vld [vmem:[%s4 + $0x8] sm:$0xff]
  %v22 = vld [vmem:[%s4] sm:$0x1]
  %v23 = vld [vmem:[%s1] sm:$0x1]
  %25 = vset.pattern.permute.xlu0 3
  %26 = vperm.xlu0 %25, %v20
  %v27 = vpop.permute.xlu0 %26
  %v30 = vperm.slane %v23, 0
  %v32 = vmul.f32 %v27, %v30
  %v33 = vand.u32 2147483647, %v32
  %vm34 = vcmp.le.f32.partialorder %v33, 0.7853982
  %vm35 = vcmp.lt.s32.totalorder %v32, 0
  %v36 = vand.u32 %v32, 2139095040
  %v37 = vshrl.u32 %v36, 23
  %v38 = vsub.s32 %v37, 127
  %v39 = vand.u32 2147483647, %v32
  %v40 = vand.u32 %v39, 8388607
  %v41 = vor.u32 %v40, 8388608
  %v42 = vsub.s32 0, %v41
  %v43 = vadd.s32 %v38, 1
  %vm44 = vcmp.gt.s32.totalorder %v43, 0
  %v45 = vsel %vm44, %v43, 0
  %v46 = vshrl.u32 %v45, 5
  %v47 = vand.u32 %v45, 31
  %v48 = vsub.s32 32, %v47
  %v49 = vshrl.u32 683565275, %v48
  %v50 = vshll.u32 683565275, %v47
  %v51 = vshrl.u32 2475754826, %v48
  %v52 = vor.u32 %v50, %v51
  %v53 = vshll.u32 2475754826, %v47
  %v54 = vshrl.u32 2131351028, %v48
  %v55 = vor.u32 %v53, %v54
  %v56 = vshll.u32 2131351028, %v47
  %v57 = vshrl.u32 2102212464, %v48
  %v58 = vor.u32 %v56, %v57
  %v59 = vshll.u32 2102212464, %v47
  %v60 = vshrl.u32 920167782, %v48
  %v61 = vor.u32 %v59, %v60
  %v62 = vshll.u32 920167782, %v47
  %v63 = vshrl.u32 1326507024, %v48
  %v64 = vor.u32 %v62, %v63
  %vm65 = vcmp.lt.s32.totalorder %v46, 1
  %vm66 = vcmp.lt.s32.totalorder %v46, 2
  %vm67 = vcmp.lt.s32.totalorder %v46, 3
  %vm68 = vcmp.lt.s32.totalorder %v46, 4
  %v69 = vsel %vm65, %v49, %v52
  %v70 = vsel %vm68, %v58, 2102212464
  %v71 = vsel %vm67, %v55, %v70
  %v72 = vsel %vm66, %v69, %v71
  %v73 = vsel %vm65, %v52, %v55
  %v74 = vsel %vm68, %v61, 920167782
  %v75 = vsel %vm67, %v58, %v74
  %v76 = vsel %vm66, %v73, %v75
  %v77 = vsel %vm65, %v55, %v58
  %v78 = vsel %vm68, %v64, 1326507024
  %v79 = vsel %vm67, %v61, %v78
  %v80 = vsel %vm66, %v77, %v79
  %v81 = vshll.u32 %v41, 8
  %v82 = vand.u32 %v81, 65535
  %v83 = vshrl.u32 %v81, 16
  %v84 = vand.u32 %v80, 65535
  %v85 = vshrl.u32 %v80, 16
  %v86 = vmul.u32 %v82, %v84
  %v87 = vmul.u32 %v82, %v85
  %v88 = vmul.u32 %v83, %v84
  %v89 = vmul.u32 %v83, %v85
  %v90 = vshll.u32 %v87, 16
  %v91 = vshrl.u32 %v87, 16
  %v92 = vshll.u32 %v88, 16
  %v93 = vshrl.u32 %v88, 16
  %vm94 = vc.u32 %v86, %v90
  %v95 = vsel %vm94, 1, 0
  %v96 = vadd.s32 %v86, %v90
  %v97 = vadd.s32 %v89, %v95
  %vm98 = vc.u32 %v96, %v92
  %v99 = vsel %vm98, 1, 0
  %v100 = vadd.s32 %v96, %v92
  %v101 = vadd.s32 %v97, %v99
  %v102 = vadd.s32 %v101, %v91
  %v103 = vadd.s32 %v102, %v93
  %v104 = vand.u32 %v81, 65535
  %v105 = vshrl.u32 %v81, 16
  %v106 = vand.u32 %v76, 65535
  %v107 = vshrl.u32 %v76, 16
  %v108 = vmul.u32 %v104, %v106
  %v109 = vmul.u32 %v104, %v107
  %v110 = vmul.u32 %v105, %v106
  %v111 = vmul.u32 %v105, %v107
  %v112 = vshll.u32 %v109, 16
  %v113 = vshrl.u32 %v109, 16
  %v114 = vshll.u32 %v110, 16
  %v115 = vshrl.u32 %v110, 16
  %vm116 = vc.u32 %v108, %v112
  %v117 = vsel %vm116, 1, 0
  %v118 = vadd.s32 %v108, %v112
  %v119 = vadd.s32 %v111, %v117
  %vm120 = vc.u32 %v118, %v114
  %v121 = vsel %vm120, 1, 0
  %v122 = vadd.s32 %v118, %v114
  %v123 = vadd.s32 %v119, %v121
  %v124 = vadd.s32 %v123, %v113
  %v125 = vadd.s32 %v124, %v115
  %v126 = vmul.u32 %v81, %v72
  %v127 = vadd.s32 %v103, %v122
  %vm128 = vc.u32 %v103, %v122
  %v129 = vadd.s32 %v125, 1
  %v130 = vsel %vm128, %v129, %v125
  %v131 = vadd.s32 %v126, %v130
  %v132 = vadd.s32 %v131, 536870912
  %v133 = vshrl.u32 %v132, 30
  %v134 = vshll.u32 %v133, 30
  %v135 = vsub.s32 %v131, %v134
  %vm136 = vcmp.lt.s32.totalorder %v135, 0
  %v137 = vsub.s32 0, %v135
  %v138 = vsel %vm136, %v137, %v135
  %v139 = vclz %v138
  %v140 = vsub.s32 %v139, 2
  %vm141 = vcmp.gt.s32.totalorder 0, %v140
  %v142 = vsel %vm141, 0, %v140
  %v143 = vsub.s32 32, %v142
  %v144 = vshll.u32 %v135, %v142
  %v145 = vshrl.u32 %v127, %v143
  %v146 = vor.u32 %v144, %v145
  %v147 = vsub.s32 4294967266, %v142
  %v148 = vadd.s32 %v147, 127
  %v149 = vshll.u32 %v148, 23
  %v150 = vor.u32 4788187, %v149
  %v151 = vand.u32 2147483647, %v150
  %v153 = vcvt.s32.f32 %v146
  %v154 = vmul.f32 %v153, %v151
  %v155 = vxor.u32 %v154, 2147483648
  %v156 = vsel %vm35, %v155, %v154
  %v157 = vsub.s32 4, %v133
  %v158 = vsel %vm35, %v157, %v133
  %v159 = vsel %vm34, %v32, %v156
  %v160 = vsel %vm34, 0, %v158
  %v161 = vmul.f32 %v159, %v159
  %v162 = vmul.f32 %v161, -0.001358992
  %v163 = vadd.f32 %v162, 0.041655596
  %v164 = vmul.f32 %v161, %v163
  %v165 = vadd.f32 %v164, -0.4999988
  %v166 = vmul.f32 %v161, %v165
  %v167 = vadd.f32 1.0, %v166
  %v168 = vmul.f32 %v159, %v159
  %v169 = vmul.f32 %v168, -0.00019511016
  %v170 = vadd.f32 %v169, 0.008332121
  %v171 = vmul.f32 %v168, %v170
  %v172 = vadd.f32 %v171, -0.16666654
  %v173 = vmul.f32 %v168, %v172
  %v174 = vadd.f32 %v173, 1.0
  %v175 = vmul.f32 %v174, %v159
  %vm176 = vweird.f32 %v32
  %v177 = vadd.s32 %v160, 3
  %v178 = vand.u32 %v177, 3
  %vm179 = vcmp.lt.s32.totalorder %v178, 2
  %vm180 = vcmp.eq.s32.totalorder %v178, 0
  %v181 = vxor.u32 %v175, 2147483648
  %v182 = vsel %vm180, %v167, %v181
  %vm183 = vcmp.eq.s32.totalorder %v178, 2
  %v184 = vxor.u32 %v167, 2147483648
  %v185 = vsel %vm183, %v184, %v175
  %v186 = vsel %vm179, %v182, %v185
  %v187 = vsel %vm176, nan, %v186
  %v188 = vand.u32 2147483647, %v32
  %vm189 = vcmp.le.f32.partialorder %v188, 0.7853982
  %vm190 = vcmp.lt.s32.totalorder %v32, 0
  %v191 = vand.u32 %v32, 2139095040
  %v192 = vshrl.u32 %v191, 23
  %v193 = vsub.s32 %v192, 127
  %v194 = vand.u32 2147483647, %v32
  %v195 = vand.u32 %v194, 8388607
  %v196 = vor.u32 %v195, 8388608
  %v197 = vsub.s32 0, %v196
  %v198 = vadd.s32 %v193, 1
  %vm199 = vcmp.gt.s32.totalorder %v198, 0
  %v200 = vsel %vm199, %v198, 0
  %v201 = vshrl.u32 %v200, 5
  %v202 = vand.u32 %v200, 31
  %v203 = vsub.s32 32, %v202
  %v204 = vshrl.u32 683565275, %v203
  %v205 = vshll.u32 683565275, %v202
  %v206 = vshrl.u32 2475754826, %v203
  %v207 = vor.u32 %v205, %v206
  %v208 = vshll.u32 2475754826, %v202
  %v209 = vshrl.u32 2131351028, %v203
  %v210 = vor.u32 %v208, %v209
  %v211 = vshll.u32 2131351028, %v202
  %v212 = vshrl.u32 2102212464, %v203
  %v213 = vor.u32 %v211, %v212
  %v214 = vshll.u32 2102212464, %v202
  %v215 = vshrl.u32 920167782, %v203
  %v216 = vor.u32 %v214, %v215
  %v217 = vshll.u32 920167782, %v202
  %v218 = vshrl.u32 1326507024, %v203
  %v219 = vor.u32 %v217, %v218
  %vm220 = vcmp.lt.s32.totalorder %v201, 1
  %vm221 = vcmp.lt.s32.totalorder %v201, 2
  %vm222 = vcmp.lt.s32.totalorder %v201, 3
  %vm223 = vcmp.lt.s32.totalorder %v201, 4
  %v224 = vsel %vm220, %v204, %v207
  %v225 = vsel %vm223, %v213, 2102212464
  %v226 = vsel %vm222, %v210, %v225
  %v227 = vsel %vm221, %v224, %v226
  %v228 = vsel %vm220, %v207, %v210
  %v229 = vsel %vm223, %v216, 920167782
  %v230 = vsel %vm222, %v213, %v229
  %v231 = vsel %vm221, %v228, %v230
  %v232 = vsel %vm220, %v210, %v213
  %v233 = vsel %vm223, %v219, 1326507024
  %v234 = vsel %vm222, %v216, %v233
  %v235 = vsel %vm221, %v232, %v234
  %v236 = vshll.u32 %v196, 8
  %v237 = vand.u32 %v236, 65535
  %v238 = vshrl.u32 %v236, 16
  %v239 = vand.u32 %v235, 65535
  %v240 = vshrl.u32 %v235, 16
  %v241 = vmul.u32 %v237, %v239
  %v242 = vmul.u32 %v237, %v240
  %v243 = vmul.u32 %v238, %v239
  %v244 = vmul.u32 %v238, %v240
  %v245 = vshll.u32 %v242, 16
  %v246 = vshrl.u32 %v242, 16
  %v247 = vshll.u32 %v243, 16
  %v248 = vshrl.u32 %v243, 16
  %vm249 = vc.u32 %v241, %v245
  %v250 = vsel %vm249, 1, 0
  %v251 = vadd.s32 %v241, %v245
  %v252 = vadd.s32 %v244, %v250
  %vm253 = vc.u32 %v251, %v247
  %v254 = vsel %vm253, 1, 0
  %v255 = vadd.s32 %v251, %v247
  %v256 = vadd.s32 %v252, %v254
  %v257 = vadd.s32 %v256, %v246
  %v258 = vadd.s32 %v257, %v248
  %v259 = vand.u32 %v236, 65535
  %v260 = vshrl.u32 %v236, 16
  %v261 = vand.u32 %v231, 65535
  %v262 = vshrl.u32 %v231, 16
  %v263 = vmul.u32 %v259, %v261
  %v264 = vmul.u32 %v259, %v262
  %v265 = vmul.u32 %v260, %v261
  %v266 = vmul.u32 %v260, %v262
  %v267 = vshll.u32 %v264, 16
  %v268 = vshrl.u32 %v264, 16
  %v269 = vshll.u32 %v265, 16
  %v270 = vshrl.u32 %v265, 16
  %vm271 = vc.u32 %v263, %v267
  %v272 = vsel %vm271, 1, 0
  %v273 = vadd.s32 %v263, %v267
  %v274 = vadd.s32 %v266, %v272
  %vm275 = vc.u32 %v273, %v269
  %v276 = vsel %vm275, 1, 0
  %v277 = vadd.s32 %v273, %v269
  %v278 = vadd.s32 %v274, %v276
  %v279 = vadd.s32 %v278, %v268
  %v280 = vadd.s32 %v279, %v270
  %v281 = vmul.u32 %v236, %v227
  %v282 = vadd.s32 %v258, %v277
  %vm283 = vc.u32 %v258, %v277
  %v284 = vadd.s32 %v280, 1
  %v285 = vsel %vm283, %v284, %v280
  %v286 = vadd.s32 %v281, %v285
  %v287 = vadd.s32 %v286, 536870912
  %v288 = vshrl.u32 %v287, 30
  %v289 = vshll.u32 %v288, 30
  %v290 = vsub.s32 %v286, %v289
  %vm291 = vcmp.lt.s32.totalorder %v290, 0
  %v292 = vsub.s32 0, %v290
  %v293 = vsel %vm291, %v292, %v290
  %v294 = vclz %v293
  %v295 = vsub.s32 %v294, 2
  %vm296 = vcmp.gt.s32.totalorder 0, %v295
  %v297 = vsel %vm296, 0, %v295
  %v298 = vsub.s32 32, %v297
  %v299 = vshll.u32 %v290, %v297
  %v300 = vshrl.u32 %v282, %v298
  %v301 = vor.u32 %v299, %v300
  %v302 = vsub.s32 4294967266, %v297
  %v303 = vadd.s32 %v302, 127
  %v304 = vshll.u32 %v303, 23
  %v305 = vor.u32 4788187, %v304
  %v306 = vand.u32 2147483647, %v305
  %v308 = vcvt.s32.f32 %v301
  %v309 = vmul.f32 %v308, %v306
  %v310 = vxor.u32 %v309, 2147483648
  %v311 = vsel %vm190, %v310, %v309
  %v312 = vsub.s32 4, %v288
  %v313 = vsel %vm190, %v312, %v288
  %v314 = vsel %vm189, %v32, %v311
  %v315 = vsel %vm189, 0, %v313
  %v316 = vmul.f32 %v314, %v314
  %v317 = vmul.f32 %v316, -0.001358992
  %v318 = vadd.f32 %v317, 0.041655596
  %v319 = vmul.f32 %v316, %v318
  %v320 = vadd.f32 %v319, -0.4999988
  %v321 = vmul.f32 %v316, %v320
  %v322 = vadd.f32 1.0, %v321
  %v323 = vmul.f32 %v314, %v314
  %v324 = vmul.f32 %v323, -0.00019511016
  %v325 = vadd.f32 %v324, 0.008332121
  %v326 = vmul.f32 %v323, %v325
  %v327 = vadd.f32 %v326, -0.16666654
  %v328 = vmul.f32 %v323, %v327
  %v329 = vadd.f32 %v328, 1.0
  %v330 = vmul.f32 %v329, %v314
  %vm331 = vweird.f32 %v32
  %v332 = vand.u32 %v315, 3
  %vm333 = vcmp.lt.s32.totalorder %v332, 2
  %vm334 = vcmp.eq.s32.totalorder %v332, 0
  %v335 = vxor.u32 %v330, 2147483648
  %v336 = vsel %vm334, %v322, %v335
  %vm337 = vcmp.eq.s32.totalorder %v332, 2
  %v338 = vxor.u32 %v322, 2147483648
  %v339 = vsel %vm337, %v338, %v330
  %v340 = vsel %vm333, %v336, %v339
  %v341 = vsel %vm331, nan, %v340
  %v342 = vld [vmem:[%s2] sm:$0xff]
  %v343 = vld [vmem:[%s2 + $0x8] sm:$0xff]
  %v344 = vld [vmem:[%s0] sm:$0xff]
  %v345 = vld [vmem:[%s0 + $0x8] sm:$0xff]
  %v346 = vld [vmem:[%s0 + $0x10] sm:$0xff]
  %v347 = vld [vmem:[%s0 + $0x18] sm:$0xff]
  %v348 = vld [vmem:[%s0 + $0x20] sm:$0xff]
  %v349 = vld [vmem:[%s0 + $0x28] sm:$0xff]
  %v350 = vld [vmem:[%s0 + $0x30] sm:$0xff]
  %v351 = vld [vmem:[%s0 + $0x38] sm:$0xff]
  %v352 = vld [vmem:[%s0 + $0x40] sm:$0xff]
  %v353 = vld [vmem:[%s0 + $0x48] sm:$0xff]
  %v354 = vld [vmem:[%s0 + $0x50] sm:$0xff]
  %v355 = vld [vmem:[%s0 + $0x58] sm:$0xff]
  %v356 = vld [vmem:[%s0 + $0x60] sm:$0xff]
  %v357 = vld [vmem:[%s0 + $0x68] sm:$0xff]
  %v358 = vld [vmem:[%s0 + $0x70] sm:$0xff]
  %v359 = vld [vmem:[%s0 + $0x78] sm:$0xff]
  %362 = vrot.lane.b32.xlu0 %v342, 120
  %v363 = vpop.permute.xlu0 %362
  %364 = vrot.lane.b32.xlu0 %v343, 120
  %v365 = vpop.permute.xlu0 %364
  %vm366 = vcmask 64512
  %v367 = vsel %vm366, %v363, 0
  %v369 = vsel %vm366, %v365, 0
  %371 = vmatpush.msra.mxu0 0.0
  %372 = vmatpush.msra.mxu0 0.0
  %373 = vmatpush.msra.mxu0 0.0
  %374 = vmatpush.msra.mxu0 0.0
  %375 = vmatpush.msra.mxu0 0.0
  %376 = vmatpush.msra.mxu0 0.0
  %377 = vmatpush.msra.mxu0 0.0
  %378 = vmatpush.msra.mxu0 0.0
  %379 = vmatpush.msra.mxu0 0.0
  %380 = vmatpush.msra.mxu0 0.0
  %381 = vmatpush.msra.mxu0 0.0
  %382 = vmatpush.msra.mxu0 0.0
  %383 = vmatpush.msra.mxu0 0.0
  %384 = vmatpush.msra.mxu0 0.0
  %385 = vmatpush.msra.mxu0 0.0
  %386 = vmatpush.msra.mxu0 %v187
  %387 = vmatmul.f32.gmra.mxu0 %v367
  %v388 = vpop.f32.mrf.mxu0
  %v389 = vadd.f32 0.0, %v388
  %390 = vmatmul.f32.gmra.mxu0 %v369
  %v391 = vpop.f32.mrf.mxu0
  %v392 = vadd.f32 0.0, %v391
  %393 = vdwg.mxu0
  %v394 = vsel %vm366, %v342, 0
  %v396 = vsel %vm366, %v343, 0
  %v399 = vsel %vm366, %v344, 0
  %v402 = vsel %vm366, %v345, 0
  %v405 = vsel %vm366, %v346, 0
  %v408 = vsel %vm366, %v347, 0
  %v411 = vsel %vm366, %v348, 0
  %v414 = vsel %vm366, %v349, 0
  %v417 = vsel %vm366, %v350, 0
  %v420 = vsel %vm366, %v351, 0
  %v423 = vsel %vm366, %v352, 0
  %v426 = vsel %vm366, %v353, 0
  %v429 = vsel %vm366, %v354, 0
  %v432 = vsel %vm366, %v355, 0
  %v435 = vsel %vm366, %v356, 0
  %v438 = vsel %vm366, %v357, 0
  %v441 = vsel %vm366, %v358, 0
  %v444 = vsel %vm366, %v359, 0
  %446 = vmatpush.xpose.msra.mxu0 %v444
  %447 = vmatpush.xpose.msra.mxu0 %v441
  %448 = vmatpush.xpose.msra.mxu0 %v438
  %449 = vmatpush.xpose.msra.mxu0 %v435
  %450 = vmatpush.xpose.msra.mxu0 %v432
  %451 = vmatpush.xpose.msra.mxu0 %v429
  %452 = vmatpush.xpose.msra.mxu0 %v426
  %453 = vmatpush.xpose.msra.mxu0 %v423
  %454 = vmatpush.xpose.msra.mxu0 %v420
  %455 = vmatpush.xpose.msra.mxu0 %v417
  %456 = vmatpush.xpose.msra.mxu0 %v414
  %457 = vmatpush.xpose.msra.mxu0 %v411
  %458 = vmatpush.xpose.msra.mxu0 %v408
  %459 = vmatpush.xpose.msra.mxu0 %v405
  %460 = vmatpush.xpose.msra.mxu0 %v402
  %461 = vmatpush.xpose.msra.mxu0 %v399
  %462 = vmatmul.f32.gmra.mxu0 %v394
  %v463 = vpop.f32.mrf.mxu0
  %v464 = vadd.f32 %v389, %v463
  %465 = vmatmul.f32.gmra.mxu0 %v396
  %v466 = vpop.f32.mrf.mxu0
  %v467 = vadd.f32 %v392, %v466
  %468 = vdwg.mxu0
  %469 = vrot.lane.b32.xlu0 %v342, 112
  %v470 = vpop.permute.xlu0 %469
  %471 = vrot.lane.b32.xlu0 %v343, 112
  %v472 = vpop.permute.xlu0 %471
  %v473 = vsel %vm366, %v470, 0
  %v475 = vsel %vm366, %v472, 0
  %477 = vmatpush.msra.mxu0 0.0
  %478 = vmatpush.msra.mxu0 0.0
  %479 = vmatpush.msra.mxu0 0.0
  %480 = vmatpush.msra.mxu0 0.0
  %481 = vmatpush.msra.mxu0 0.0
  %482 = vmatpush.msra.mxu0 0.0
  %483 = vmatpush.msra.mxu0 0.0
  %484 = vmatpush.msra.mxu0 0.0
  %485 = vmatpush.msra.mxu0 0.0
  %486 = vmatpush.msra.mxu0 0.0
  %487 = vmatpush.msra.mxu0 0.0
  %488 = vmatpush.msra.mxu0 0.0
  %489 = vmatpush.msra.mxu0 0.0
  %490 = vmatpush.msra.mxu0 0.0
  %491 = vmatpush.msra.mxu0 0.0
  %492 = vmatpush.msra.mxu0 %v341
  %493 = vmatmul.f32.gmra.mxu0 %v473
  %v494 = vpop.f32.mrf.mxu0
  %v495 = vadd.f32 0.0, %v494
  %496 = vmatmul.f32.gmra.mxu0 %v475
  %v497 = vpop.f32.mrf.mxu0
  %v498 = vadd.f32 0.0, %v497
  %499 = vdwg.mxu0
  %v500 = vadd.f32 %v464, %v495
  %v501 = vadd.f32 %v467, %v498
  %502 = vset.pattern.permute.xlu0 0
  %503 = vperm.xlu0 %502, %v20
  %v504 = vpop.permute.xlu0 %503
  %507 = vset.pattern.permute.xlu0 0
  %508 = vperm.xlu0 %507, %v21
  %v509 = vpop.permute.xlu0 %508
  %v511 = vadd.f32 %v500, %v504
  %v512 = vadd.f32 %v501, %v509
  %v513 = vmul.f32 %v511, 0.5
  %v514 = vmul.f32 %v512, 0.5
  %v515 = vtanh.pop %v513
  %v516 = vtanh.pop %v514
  %v517 = vmul.f32 %v515, 0.5
  %v518 = vmul.f32 %v516, 0.5
  %v519 = vadd.f32 %v517, 0.5
  %v520 = vadd.f32 %v518, 0.5
  %v521 = vmul.f32 %v511, %v519
  %v522 = vmul.f32 %v512, %v520
  %v523 = vld [vmem:[%s3] sm:$0xff]
  %v524 = vld [vmem:[%s3 + $0x8] sm:$0xff]
  %527 = vrot.lane.b32.xlu0 %v523, 112
  %v528 = vpop.permute.xlu0 %527
  %529 = vrot.lane.b32.xlu0 %v524, 112
  %v530 = vpop.permute.xlu0 %529
  %v531 = vsel %vm366, %v528, 0
  %v533 = vsel %vm366, %v530, 0
  %535 = vmatpush.msra.mxu0 0.0
  %536 = vmatpush.msra.mxu0 0.0
  %537 = vmatpush.msra.mxu0 0.0
  %538 = vmatpush.msra.mxu0 0.0
  %539 = vmatpush.msra.mxu0 0.0
  %540 = vmatpush.msra.mxu0 0.0
  %541 = vmatpush.msra.mxu0 0.0
  %542 = vmatpush.msra.mxu0 0.0
  %543 = vmatpush.msra.mxu0 0.0
  %544 = vmatpush.msra.mxu0 0.0
  %545 = vmatpush.msra.mxu0 0.0
  %546 = vmatpush.msra.mxu0 0.0
  %547 = vmatpush.msra.mxu0 0.0
  %548 = vmatpush.msra.mxu0 0.0
  %549 = vmatpush.msra.mxu0 0.0
  %550 = vmatpush.msra.mxu0 %v187
  %551 = vmatmul.f32.gmra.mxu0 %v531
  %v552 = vpop.f32.mrf.mxu0
  %v553 = vadd.f32 0.0, %v552
  %554 = vmatmul.f32.gmra.mxu0 %v533
  %v555 = vpop.f32.mrf.mxu0
  %v556 = vadd.f32 0.0, %v555
  %557 = vdwg.mxu0
  %vm558 = vcmask 130048
  %v559 = vsel %vm558, %v523, 0
  %v561 = vsel %vm558, %v524, 0
  %563 = vmatpush.msra.mxu0 0.0
  %564 = vmatpush.msra.mxu0 0.0
  %565 = vmatpush.msra.mxu0 0.0
  %566 = vmatpush.msra.mxu0 0.0
  %567 = vmatpush.msra.mxu0 0.0
  %568 = vmatpush.msra.mxu0 0.0
  %569 = vmatpush.msra.mxu0 0.0
  %570 = vmatpush.msra.mxu0 0.0
  %571 = vmatpush.msra.mxu0 0.0
  %572 = vmatpush.msra.mxu0 0.0
  %573 = vmatpush.msra.mxu0 0.0
  %574 = vmatpush.msra.mxu0 0.0
  %575 = vmatpush.msra.mxu0 0.0
  %576 = vmatpush.msra.mxu0 0.0
  %577 = vmatpush.msra.mxu0 %v522
  %578 = vmatpush.msra.mxu0 %v521
  %579 = vmatmul.f32.gmra.mxu0 %v559
  %v580 = vpop.f32.mrf.mxu0
  %v581 = vadd.f32 %v553, %v580
  %582 = vmatmul.f32.gmra.mxu0 %v561
  %v583 = vpop.f32.mrf.mxu0
  %v584 = vadd.f32 %v556, %v583
  %585 = vdwg.mxu0
  %586 = vrot.lane.b32.xlu0 %v523, 104
  %v587 = vpop.permute.xlu0 %586
  %588 = vrot.lane.b32.xlu0 %v524, 104
  %v589 = vpop.permute.xlu0 %588
  %v590 = vsel %vm366, %v587, 0
  %v592 = vsel %vm366, %v589, 0
  %594 = vmatpush.msra.mxu0 0.0
  %595 = vmatpush.msra.mxu0 0.0
  %596 = vmatpush.msra.mxu0 0.0
  %597 = vmatpush.msra.mxu0 0.0
  %598 = vmatpush.msra.mxu0 0.0
  %599 = vmatpush.msra.mxu0 0.0
  %600 = vmatpush.msra.mxu0 0.0
  %601 = vmatpush.msra.mxu0 0.0
  %602 = vmatpush.msra.mxu0 0.0
  %603 = vmatpush.msra.mxu0 0.0
  %604 = vmatpush.msra.mxu0 0.0
  %605 = vmatpush.msra.mxu0 0.0
  %606 = vmatpush.msra.mxu0 0.0
  %607 = vmatpush.msra.mxu0 0.0
  %608 = vmatpush.msra.mxu0 0.0
  %609 = vmatpush.msra.mxu0 %v341
  %610 = vmatmul.f32.gmra.mxu0 %v590
  %v611 = vpop.f32.mrf.mxu0
  %v612 = vadd.f32 0.0, %v611
  %613 = vmatmul.f32.gmra.mxu0 %v592
  %v614 = vpop.f32.mrf.mxu0
  %v615 = vadd.f32 0.0, %v614
  %616 = vdwg.mxu0
  %v617 = vadd.f32 %v581, %v612
  %v618 = vadd.f32 %v584, %v615
  %619 = vset.pattern.permute.xlu0 1
  %620 = vperm.xlu0 %619, %v20
  %v621 = vpop.permute.xlu0 %620
  %623 = vset.pattern.permute.xlu0 1
  %624 = vperm.xlu0 %623, %v21
  %v625 = vpop.permute.xlu0 %624
  %v627 = vadd.f32 %v617, %v621
  %v628 = vadd.f32 %v618, %v625
  %v629 = vmul.f32 %v627, 0.5
  %v630 = vmul.f32 %v628, 0.5
  %v631 = vtanh.pop %v629
  %v632 = vtanh.pop %v630
  %v633 = vmul.f32 %v631, 0.5
  %v634 = vmul.f32 %v632, 0.5
  %v635 = vadd.f32 %v633, 0.5
  %v636 = vadd.f32 %v634, 0.5
  %v637 = vmul.f32 %v627, %v635
  %v638 = vmul.f32 %v628, %v636
  %639 = vset.pattern.permute.xlu0 2
  %640 = vperm.xlu0 %639, %v20
  %v641 = vpop.permute.xlu0 %640
  %643 = vset.pattern.permute.xlu0 2
  %644 = vperm.xlu0 %643, %v21
  %v645 = vpop.permute.xlu0 %644
  %v647 = vmul.f32 %v637, %v641
  %v648 = vmul.f32 %v638, %v645
  %v649 = vadd.f32 %v647, %v648
  %v650 = vrot.slane %v649, 4
  %v651 = vadd.f32 %v649, %v650
  %v652 = vrot.slane %v651, 2
  %v653 = vadd.f32 %v651, %v652
  %v654 = vrot.slane %v653, 1
  %v655 = vadd.f32 %v653, %v654
  %657 = vset.pattern.permute.xlu0 4
  %658 = vperm.xlu0 %657, %v22
  %v659 = vpop.permute.xlu0 %658
  %v661 = vadd.f32 %v655, %v659
  %662 = vst [vmem:[%s5] sm:$0x1] %v661
  // Predicated region
  $region22: #{my_ufunc_temb_forward.1} parent=0 // pred_check
    _
  $region23: #{my_ufunc_temb_forward.1} parent=0 // pred_check_branch
    %664 = sbr.rel (0) target = $region25
  $region24: #{my_ufunc_temb_forward.1} parent=0 // pred_region
    _
  $region25: #{my_ufunc_temb_forward.1} parent=0 // pred_fallthru
    _
  // Predicated region
  $region26: #{my_ufunc_temb_forward.1} parent=0 // pred_check
    _
  $region27: #{my_ufunc_temb_forward.1} parent=0 // pred_check_branch
    %666 = sbr.rel (0) target = $region29
  $region28: #{my_ufunc_temb_forward.1} parent=0 // pred_region
    _
  $region29: #{my_ufunc_temb_forward.1} parent=0 // pred_fallthru
    _

</llo_original>
